<compile_context>
chip_gen: v7x
topology: tpu7x:2x2x1
jax: 0.10.0
libtpu: 0.0.40
codegen_flags: <defaults>
</compile_context>

<pallas_src>
import functools

import jax
import jax.numpy as jnp
from jax import lax
from jax.experimental import pallas as pl
from jax.experimental.pallas import tpu as pltpu


# --------------------------------------------------------------------------- #
# Kernel
# --------------------------------------------------------------------------- #
def cnn_text_fused_kernel(x_ref, w_ref, b_ref, m_ref, o_ref, xs_ref, *, k_max):
    """Fused text-CNN branch stack.

    x_ref : (TB, L, E)            bf16, one batch tile of embeddings (unpadded)
    w_ref : (k_max, E, F_pad)     bf16, tap-padded / filter-packed conv weights
    b_ref : (1, F_pad)            f32,  packed bias
    m_ref : (max(k_max-1,1), F_pad) f32, additive validity mask for the tail
                                         time positions (0 valid / -1e30 invalid)
    o_ref : (TB, F_pad)           f32,  pooled features
    xs_ref: (TB, L + k_max - 1, E) bf16 VMEM scratch (time-zero-padded x)
    """
    TB, L, E = x_ref.shape
    T = L  # conv positions evaluated (per-branch validity handled by the mask)

    # Stage the x block into the time-padded scratch; zero the k_max-1 pad rows
    # every step (tiny store) so correctness never depends on which core ran
    # grid step 0.
    xs_ref[:, :L, :] = x_ref[...]
    if k_max > 1:
        xs_ref[:, L:, :] = jnp.zeros((TB, k_max - 1, E), jnp.bfloat16)

    # One accumulating bf16 MXU dot per conv tap, f32 accumulation.  No im2col
    # concat, no (TB,T,k_max*E) patches buffer.
    acc = None
    for i in range(k_max):
        part = lax.dot_general(
            xs_ref[:, i:i + T, :], w_ref[i],
            dimension_numbers=(((2,), (0,)), ((), ())),
            preferred_element_type=jnp.float32)           # (TB, T, F_pad)
        acc = part if acc is None else acc + part

    # Time max-pool.  Only the last k_max-1 positions can be invalid for any
    # branch, so the additive -1e30 mask is applied to that tail only.
    t_valid = T - (k_max - 1)
    pooled = jnp.max(acc[:, :t_valid, :], axis=1)         # (TB, F_pad)
    if k_max > 1:
        tail = acc[:, t_valid:, :] + m_ref[...][None]     # (TB, k_max-1, F_pad)
        pooled = jnp.maximum(pooled, jnp.max(tail, axis=1))

    # Bias + ReLU after the max (exact reordering: bias is time-invariant and
    # ReLU is monotone), so per-element VPU work is O(B*F) not O(B*T*F).
    o_ref[...] = jnp.maximum(pooled + b_ref[...], 0.0).astype(o_ref.dtype)


# --------------------------------------------------------------------------- #
# One-time parameter packing (hoisted out of the per-call forward path)
# --------------------------------------------------------------------------- #
def pack_cnn_text_params(weights, biases, kernel_sizes):
    """weights[j]: (k_j, E, F) f32; biases[j]: (1, F) f32."""
    kernel_sizes = tuple(int(k) for k in kernel_sizes)
    k_max = max(kernel_sizes)
    F = int(weights[0].shape[-1])
    E = int(weights[0].shape[-2])
    F_total = F * len(kernel_sizes)
    F_pad = pl.cdiv(F_total, 128) * 128          # lane-dense weight/output width
    n_tail = max(k_max - 1, 1)

    w_packed = jnp.zeros((k_max, E, F_pad), jnp.float32)
    b_packed = jnp.zeros((1, F_pad), jnp.float32)
    tail_mask = jnp.zeros((n_tail, F_pad), jnp.float32)
    p_idx = jnp.arange(n_tail)[:, None]

    for j, (k, w, b) in enumerate(zip(kernel_sizes, weights, biases)):
        assert w.shape == (k, E, F) and b.shape == (1, F)
        lo, hi = j * F, (j + 1) * F
        w_packed = w_packed.at[:k, :, lo:hi].set(w)
        b_packed = b_packed.at[:, lo:hi].set(b)
        if k_max > 1:
            # tail position p corresponds to t = (L - k_max + 1) + p; it is
            # invalid for branch k iff p >= k_max - k  (independent of L).
            invalid = p_idx >= (k_max - k)
            tail_mask = tail_mask.at[:, lo:hi].set(
                jnp.where(jnp.broadcast_to(invalid, (n_tail, F)),
                          -1e30, 0.0).astype(jnp.float32))

    return {
        "w": w_packed.astype(jnp.bfloat16),      # bf16 MXU path
        "b": b_packed,                           # f32 (added after the max)
        "tail_mask": tail_mask,                  # f32 (must stay f32: -1e30)
        "kernel_sizes": kernel_sizes,
        "num_filters": F,
        "f_total": F_total,
    }


# --------------------------------------------------------------------------- #
# Wrapper
# --------------------------------------------------------------------------- #
def _choose_batch_tile(B, L, E, F_pad, k_max, vmem_budget_bytes=20 << 20):
    """Batch tile: VMEM-budgeted, multiple of 8, >=2 grid steps when possible."""
    if B <= 8:
        # Tiny batches: the output block's sublane dim must equal B exactly.
        return B
    L_pad = L + k_max - 1
    per_row = (2 * L * F_pad * 4      # f32 accumulator + one dot temp
               + 2 * L * E * 2        # double-buffered bf16 x input block
               + L_pad * E * 2        # bf16 padded-x scratch
               + 2 * F_pad * 4)       # double-buffered f32 output block
    tb = (vmem_budget_bytes // per_row) // 8 * 8
    tb = int(max(8, min(512, tb)))
    # Keep at least 2 grid steps so both v7x TensorCores get work.
    half = -(-B // 2)
    half = -(-half // 8) * 8
    return int(min(tb, max(8, half)))


def cnn_text_forward(x, packed):
    """CNNText forward. x: (B, L, E); packed: from pack_cnn_text_params."""
    B, L, E = x.shape
    kernel_sizes = packed["kernel_sizes"]
    k_max = max(kernel_sizes)
    assert L >= k_max, "sequence length must be >= largest kernel size"
    w_packed, b_packed, tail_mask = packed["w"], packed["b"], packed["tail_mask"]
    F_pad = w_packed.shape[-1]
    F_total = packed["f_total"]
    L_pad = L + k_max - 1

    # bf16 activations in HBM: halves the x DMA bytes and removes the
    # per-element in-kernel cast.  (No wrapper-side time pad.)
    x = x.astype(jnp.bfloat16)

    TB = _choose_batch_tile(B, L, E, F_pad, k_max)
    grid = (pl.cdiv(B, TB),)
    # NOTE: when B is not a multiple of TB, Pallas handles the partial last
    # block; out-of-range output rows are never returned to the caller.

    out = pl.pallas_call(
        functools.partial(cnn_text_fused_kernel, k_max=k_max),
        out_shape=jax.ShapeDtypeStruct((B, F_pad), jnp.float32),
        grid=grid,
        in_specs=[
            pl.BlockSpec((TB, L, E), lambda b: (b, 0, 0)),          # x (batch-tiled, bf16)
            pl.BlockSpec((k_max, E, F_pad), lambda b: (0, 0, 0)),   # packed weights (resident)
            pl.BlockSpec((1, F_pad), lambda b: (0, 0)),             # packed bias (resident)
            pl.BlockSpec((tail_mask.shape[0], F_pad), lambda b: (0, 0)),  # tail mask (resident)
        ],
        out_specs=pl.BlockSpec((TB, F_pad), lambda b: (b, 0)),
        scratch_shapes=[pltpu.VMEM((TB, L_pad, E), jnp.bfloat16)],  # time-padded x
        compiler_params=pltpu.CompilerParams(
            dimension_semantics=("parallel",),                      # megacore on v7x
            vmem_limit_bytes=32 * 1024 * 1024),
    )(x, w_packed, b_packed, tail_mask)

    # Slice the lane-padded output back to the real feature width.
    return out[:, :F_total]
    # NOTE: self.dropout is defined in __init__ but never applied in forward(),
    # so it is (correctly) omitted here.


# --------------------------------------------------------------------------- #
# Pure-JAX reference (PyTorch forward semantics)
# --------------------------------------------------------------------------- #
def reference_forward(x, weights, biases, kernel_sizes):
    """ReLU(conv + b), then max over time, then concat — same order as PyTorch."""
    L = x.shape[1]
    outs = []
    for k, w, b in zip(kernel_sizes, weights, biases):
        T = L - k + 1
        windows = jnp.stack([x[:, t:t + k, :] for t in range(T)], axis=1)   # (B,T,k,E)
        conv = jnp.einsum("btke,kef->btf", windows, w,
                          precision=lax.Precision.HIGHEST) + b[0]           # (B,T,F)
        conv = jnp.maximum(conv, 0.0)
        outs.append(jnp.max(conv, axis=1))                                  # (B,F)
    return jnp.concatenate(outs, axis=-1)


if __name__ == "__main__":
    # Small, deterministic config (args.embed_dim=32, args.num_filters=8,
    # kernel_sizes=[2,3,4]; batch=2, seq_len=8).
    B, L, E = 2, 8, 32
    NUM_FILTERS = 8
    KERNEL_SIZES = [2, 3, 4]

    key = jax.random.PRNGKey(0)
    kx, *kws = jax.random.split(key, 1 + 2 * len(KERNEL_SIZES))

    x = jax.random.normal(kx, (B, L, E), dtype=jnp.float32)

    weights, biases = [], []
    for idx, k in enumerate(KERNEL_SIZES):
        kw, kb = kws[2 * idx], kws[2 * idx + 1]
        # PyTorch Conv2d weight shape: (F, 1, k, E) -> store as (k, E, F)
        w_torch_layout = 0.1 * jax.random.normal(
            kw, (NUM_FILTERS, 1, k, E), dtype=jnp.float32)
        w = jnp.transpose(w_torch_layout[:, 0, :, :], (1, 2, 0))   # (k, E, F)
        b = 0.1 * jax.random.normal(kb, (1, NUM_FILTERS), dtype=jnp.float32)
        weights.append(w)
        biases.append(b)

    # Pre-round x / weights to bf16-representable values so the kernel's bf16
    # path is lossless and the f32 reference sees the exact same operands
    # (keeps the tight tolerance check valid).
    x_r = x.astype(jnp.bfloat16).astype(jnp.float32)
    w_r = [w.astype(jnp.bfloat16).astype(jnp.float32) for w in weights]

    # Parameter packing is done ONCE (hoisted out of the forward path).
    packed = pack_cnn_text_params(w_r, biases, KERNEL_SIZES)

    out = cnn_text_forward(x_r, packed)
    out = jax.block_until_ready(out)

    ref = reference_forward(x_r, w_r, biases, KERNEL_SIZES)
    assert out.shape == (B, NUM_FILTERS * len(KERNEL_SIZES)), out.shape
    assert jnp.allclose(out, ref, atol=1e-4, rtol=1e-4), (out, ref)

    print("KERNEL_OK")
</pallas_src>

<mosaic_0001>
module attributes {stable_mosaic.version = 11 : i64} {
  func.func @cnn_text_fused_kernel(%arg0: i32, %arg1: memref<2x8x32xbf16, #tpu.memory_space<vmem>>, %arg2: memref<4x32x128xbf16, #tpu.memory_space<vmem>>, %arg3: memref<1x128xf32, #tpu.memory_space<vmem>>, %arg4: memref<3x128xf32, #tpu.memory_space<vmem>>, %arg5: memref<2x128xf32, #tpu.memory_space<vmem>>, %arg6: memref<2x11x32xbf16, #tpu.memory_space<vmem>>) attributes {dimension_semantics = [#tpu.dimension_semantics<parallel>], iteration_bounds = array<i64: 1>, scalar_prefetch = 0 : i64, scratch_operands = 1 : i64, tpu.core_type = #tpu.core_type<tc>, window_params = [{transform_indices = @transform_0, window_bounds = array<i64: 2, 8, 32>}, {pipeline_mode = #tpu.pipeline_mode<synchronous>, transform_indices = @transform_1, window_bounds = array<i64: 4, 32, 128>}, {pipeline_mode = #tpu.pipeline_mode<synchronous>, transform_indices = @transform_2, window_bounds = array<i64: 1, 128>}, {pipeline_mode = #tpu.pipeline_mode<synchronous>, transform_indices = @transform_3, window_bounds = array<i64: 3, 128>}, {transform_indices = @transform_4, window_bounds = array<i64: 2, 128>}]} {
    %c0 = arith.constant 0 : index
    %c0_0 = arith.constant 0 : index
    %c0_1 = arith.constant 0 : index
    %0 = vector.load %arg1[%c0, %c0_0, %c0_1] : memref<2x8x32xbf16, #tpu.memory_space<vmem>>, vector<2x8x32xbf16>
    %c0_2 = arith.constant 0 : index
    %c0_3 = arith.constant 0 : index
    %c0_4 = arith.constant 0 : index
    %1 = vector.load %arg6[%c0_2, %c0_3, %c0_4] : memref<2x11x32xbf16, #tpu.memory_space<vmem>>, vector<2x8x32xbf16>
    tpu.vector_store %arg6[%c0_2, %c0_3, %c0_4], %0 {strides = array<i32>} : memref<2x11x32xbf16, #tpu.memory_space<vmem>>, vector<2x8x32xbf16>,
    %cst = arith.constant 0.000000e+00 : bf16
    %2 = vector.broadcast %cst : bf16 to vector<2x3x32xbf16>
    %c0_5 = arith.constant 0 : index
    %c8 = arith.constant 8 : index
    %c0_6 = arith.constant 0 : index
    %3 = vector.load %arg6[%c0_5, %c8, %c0_6] : memref<2x11x32xbf16, #tpu.memory_space<vmem>>, vector<2x3x32xbf16>
    tpu.vector_store %arg6[%c0_5, %c8, %c0_6], %2 {strides = array<i32>} : memref<2x11x32xbf16, #tpu.memory_space<vmem>>, vector<2x3x32xbf16>,
    %c0_7 = arith.constant 0 : index
    %c0_8 = arith.constant 0 : index
    %c0_9 = arith.constant 0 : index
    %4 = vector.load %arg6[%c0_7, %c0_8, %c0_9] : memref<2x11x32xbf16, #tpu.memory_space<vmem>>, vector<2x8x32xbf16>
    %c0_10 = arith.constant 0 : index
    %c0_11 = arith.constant 0 : index
    %c0_12 = arith.constant 0 : index
    %5 = vector.load %arg2[%c0_10, %c0_11, %c0_12] : memref<4x32x128xbf16, #tpu.memory_space<vmem>>, vector<1x32x128xbf16>
    %6 = vector.shape_cast %5 : vector<1x32x128xbf16> to vector<32x128xbf16>
    %cst_13 = arith.constant dense<0.000000e+00> : vector<2x8x128xf32>
    %7 = tpu.matmul %4, %6, %cst_13 {dimension_numbers = #tpu.dot_dimension_numbers<[2], [0], [0, 1], [1], [0, 0, 0, 1, 1, 1], [], []>} : vector<2x8x32xbf16>, vector<32x128xbf16>, vector<2x8x128xf32> -> vector<2x8x128xf32>
    %c0_14 = arith.constant 0 : index
    %c1 = arith.constant 1 : index
    %c0_15 = arith.constant 0 : index
    %8 = vector.load %arg6[%c0_14, %c1, %c0_15] : memref<2x11x32xbf16, #tpu.memory_space<vmem>>, vector<2x8x32xbf16>
    %c1_16 = arith.constant 1 : index
    %c0_17 = arith.constant 0 : index
    %c0_18 = arith.constant 0 : index
    %9 = vector.load %arg2[%c1_16, %c0_17, %c0_18] : memref<4x32x128xbf16, #tpu.memory_space<vmem>>, vector<1x32x128xbf16>
    %10 = vector.shape_cast %9 : vector<1x32x128xbf16> to vector<32x128xbf16>
    %cst_19 = arith.constant dense<0.000000e+00> : vector<2x8x128xf32>
    %11 = tpu.matmul %8, %10, %cst_19 {dimension_numbers = #tpu.dot_dimension_numbers<[2], [0], [0, 1], [1], [0, 0, 0, 1, 1, 1], [], []>} : vector<2x8x32xbf16>, vector<32x128xbf16>, vector<2x8x128xf32> -> vector<2x8x128xf32>
    %12 = arith.addf %7, %11 : vector<2x8x128xf32>
    %c0_20 = arith.constant 0 : index
    %c2 = arith.constant 2 : index
    %c0_21 = arith.constant 0 : index
    %13 = vector.load %arg6[%c0_20, %c2, %c0_21] : memref<2x11x32xbf16, #tpu.memory_space<vmem>>, vector<2x8x32xbf16>
    %c2_22 = arith.constant 2 : index
    %c0_23 = arith.constant 0 : index
    %c0_24 = arith.constant 0 : index
    %14 = vector.load %arg2[%c2_22, %c0_23, %c0_24] : memref<4x32x128xbf16, #tpu.memory_space<vmem>>, vector<1x32x128xbf16>
    %15 = vector.shape_cast %14 : vector<1x32x128xbf16> to vector<32x128xbf16>
    %cst_25 = arith.constant dense<0.000000e+00> : vector<2x8x128xf32>
    %16 = tpu.matmul %13, %15, %cst_25 {dimension_numbers = #tpu.dot_dimension_numbers<[2], [0], [0, 1], [1], [0, 0, 0, 1, 1, 1], [], []>} : vector<2x8x32xbf16>, vector<32x128xbf16>, vector<2x8x128xf32> -> vector<2x8x128xf32>
    %17 = arith.addf %12, %16 : vector<2x8x128xf32>
    %c0_26 = arith.constant 0 : index
    %c3 = arith.constant 3 : index
    %c0_27 = arith.constant 0 : index
    %18 = vector.load %arg6[%c0_26, %c3, %c0_27] : memref<2x11x32xbf16, #tpu.memory_space<vmem>>, vector<2x8x32xbf16>
    %c3_28 = arith.constant 3 : index
    %c0_29 = arith.constant 0 : index
    %c0_30 = arith.constant 0 : index
    %19 = vector.load %arg2[%c3_28, %c0_29, %c0_30] : memref<4x32x128xbf16, #tpu.memory_space<vmem>>, vector<1x32x128xbf16>
    %20 = vector.shape_cast %19 : vector<1x32x128xbf16> to vector<32x128xbf16>
    %cst_31 = arith.constant dense<0.000000e+00> : vector<2x8x128xf32>
    %21 = tpu.matmul %18, %20, %cst_31 {dimension_numbers = #tpu.dot_dimension_numbers<[2], [0], [0, 1], [1], [0, 0, 0, 1, 1, 1], [], []>} : vector<2x8x32xbf16>, vector<32x128xbf16>, vector<2x8x128xf32> -> vector<2x8x128xf32>
    %22 = arith.addf %17, %21 : vector<2x8x128xf32>
    %23 = vector.extract_strided_slice %22 {offsets = [0, 0, 0], sizes = [2, 5, 128], strides = [1, 1, 1]} : vector<2x8x128xf32> to vector<2x5x128xf32>
    %cst_32 = arith.constant dense<0xFF800000> : vector<2x128xf32>
    %24 = vector.multi_reduction <maximumf>, %23, %cst_32 [1] : vector<2x5x128xf32> to vector<2x128xf32>
    %25 = vector.extract_strided_slice %22 {offsets = [0, 5, 0], sizes = [2, 3, 128], strides = [1, 1, 1]} : vector<2x8x128xf32> to vector<2x3x128xf32>
    %c0_33 = arith.constant 0 : index
    %c0_34 = arith.constant 0 : index
    %26 = vector.load %arg4[%c0_33, %c0_34] : memref<3x128xf32, #tpu.memory_space<vmem>>, vector<3x128xf32>
    %27 = vector.shape_cast %26 : vector<3x128xf32> to vector<1x3x128xf32>
    %28 = vector.broadcast %27 : vector<1x3x128xf32> to vector<2x3x128xf32>
    %29 = arith.addf %25, %28 : vector<2x3x128xf32>
    %cst_35 = arith.constant dense<0xFF800000> : vector<2x128xf32>
    %30 = vector.multi_reduction <maximumf>, %29, %cst_35 [1] : vector<2x3x128xf32> to vector<2x128xf32>
    %31 = arith.maximumf %24, %30 : vector<2x128xf32>
    %c0_36 = arith.constant 0 : index
    %c0_37 = arith.constant 0 : index
    %32 = vector.load %arg3[%c0_36, %c0_37] : memref<1x128xf32, #tpu.memory_space<vmem>>, vector<1x128xf32>
    %33 = vector.broadcast %32 : vector<1x128xf32> to vector<2x128xf32>
    %34 = arith.addf %31, %33 : vector<2x128xf32>
    %cst_38 = arith.constant 0.000000e+00 : f32
    %35 = vector.broadcast %cst_38 : f32 to vector<2x128xf32>
    %36 = arith.maximumf %34, %35 : vector<2x128xf32>
    %c0_39 = arith.constant 0 : index
    %c0_40 = arith.constant 0 : index
    %37 = vector.load %arg5[%c0_39, %c0_40] : memref<2x128xf32, #tpu.memory_space<vmem>>, vector<2x128xf32>
    tpu.vector_store %arg5[%c0_39, %c0_40], %36 {strides = array<i32>} : memref<2x128xf32, #tpu.memory_space<vmem>>, vector<2x128xf32>,
    return
  }
  func.func @transform_0(%arg0: i32) -> (i32, i32, i32) {
    %c0_i32 = arith.constant 0 : i32
    %c0_i32_0 = arith.constant 0 : i32
    %c0_i32_1 = arith.constant 0 : i32
    return %arg0, %c0_i32, %c0_i32_0 : i32, i32, i32
  }
  func.func @transform_1(%arg0: i32) -> (i32, i32, i32) {
    %c0_i32 = arith.constant 0 : i32
    %c0_i32_0 = arith.constant 0 : i32
    %c0_i32_1 = arith.constant 0 : i32
    %c0_i32_2 = arith.constant 0 : i32
    return %c0_i32, %c0_i32_0, %c0_i32_1 : i32, i32, i32
  }
  func.func @transform_2(%arg0: i32) -> (i32, i32) {
    %c0_i32 = arith.constant 0 : i32
    %c0_i32_0 = arith.constant 0 : i32
    %c0_i32_1 = arith.constant 0 : i32
    return %c0_i32, %c0_i32_0 : i32, i32
  }
  func.func @transform_3(%arg0: i32) -> (i32, i32) {
    %c0_i32 = arith.constant 0 : i32
    %c0_i32_0 = arith.constant 0 : i32
    %c0_i32_1 = arith.constant 0 : i32
    return %c0_i32, %c0_i32_0 : i32, i32
  }
  func.func @transform_4(%arg0: i32) -> (i32, i32) {
    %c0_i32 = arith.constant 0 : i32
    %c0_i32_0 = arith.constant 0 : i32
    return %arg0, %c0_i32 : i32, i32
  }
}

</mosaic_0001>

<llo_original>
// kernel: tpu_custom_call.1
$region0: #{tpu_custom_call.1}
  #allocation0 [shape = 'u32[]', space=smem, size = 0x4, offset = 0x4, fixed_abs, tag = 'smem constant byte address 0x4 - core index']
  #allocation1 [shape = 'u32[144,128]{1,0:T(1,128)}', space=vmem, size = 0x12000, scoped, tag = 'internal scratch']
  #allocation2 [shape = 'bf16[2,11,32]{2,1,0:T(8,128)(2,1)}', space=vmem, size = 0x2000, scoped, tag = 'scratch operand']
  %s0 = inlined_call_operand.hbm [shape: bf16[2,8,32], index: 0, kind: input, shape index: {}]
  %s1 = inlined_call_operand.hbm [shape: bf16[4,32,128], index: 1, kind: input, shape index: {}]
  %s2 = inlined_call_operand.vmem [shape: f32[1,128], index: 2, kind: input, shape index: {}]
  %s3 = inlined_call_operand.vmem [shape: f32[3,128], index: 3, kind: input, shape index: {}]
  %s4 = inlined_call_operand.hbm [shape: f32[2,128], index: 4, kind: output, shape index: {}]
  %s5 = sld [smem:[#allocation0]]
  $region34: #{tpu_custom_call.1} parent=0
    _
  %s7 = ssub.s32 1, %s5
  %s8 = scalar_select 0, %s7, %s5
  $region1: #{tpu_custom_call.1} parent=0
    #allocation3 [shape = 'u8[4096]{0}', space=vmem, size = 0x1000, scoped, tag = 'input window, operand 0, single buffered']
    #allocation4 [shape = 's32[1]{0}', space=sflag, size = 0x4, scoped, tag = 'scoped memory for tpu_custom_call.1']
    #allocation5 [shape = 's32[1]{0}', space=sflag, size = 0x4, scoped, tag = 'scoped memory for tpu_custom_call.1']
    #allocation6 [shape = 'u8[32768]{0}', space=vmem, size = 0x8000, scoped, tag = 'input window, operand 1, single buffered']
    #allocation7 [shape = 's32[1]{0}', space=sflag, size = 0x4, scoped, tag = 'scoped memory for tpu_custom_call.1']
    #allocation8 [shape = 'u8[1024]{0}', space=vmem, size = 0x400, scoped, tag = 'output window, operand 0, single buffered']
    %9 = vsyncpa [#allocation4], 0
    %10 = vsyncpa [#allocation7], 0
    %11 = vsyncpa [#allocation5], 0
    // Predicated region
    $region2: #{tpu_custom_call.1} parent=1 // pred_check
      _
    $region3: #{tpu_custom_call.1} parent=1 // pred_check_branch
      %13 = sbr.rel (0) target = $region5
    $region4: #{tpu_custom_call.1} parent=1 // pred_region
      %s15 = ssub.s32 128, 128
      %16 = vsyncadd [#allocation4], %s15
      %s17 = sshll.u32 [#allocation3], 4
      %s18 = int_to_ptr.vmem [resolvable:$true] %s17
      %23 = dma.hbm_to_vmem [thread:$0]  %s0, 128, %s18, [#allocation4], 64, 64, 4
    $region5: #{tpu_custom_call.1} parent=1 // pred_fallthru
      _
    // Predicated region
    $region6: #{tpu_custom_call.1} parent=1 // pred_check
      _
    $region7: #{tpu_custom_call.1} parent=1 // pred_check_branch
      %25 = sbr.rel (0) target = $region9
    $region8: #{tpu_custom_call.1} parent=1 // pred_region
      %s27 = ssub.s32 1024, 1024
      %28 = vsyncadd [#allocation7], %s27
      %s29 = sshll.u32 [#allocation6], 4
      %s30 = int_to_ptr.vmem [resolvable:$true] %s29
      %35 = dma.hbm_to_vmem [thread:$0]  %s1, 1024, %s30, [#allocation7], 64, 64, 4
    $region9: #{tpu_custom_call.1} parent=1 // pred_fallthru
      _
    // Predicated region
    $region10: #{tpu_custom_call.1} parent=1 // pred_check
      _
    $region11: #{tpu_custom_call.1} parent=1 // pred_check_branch
      %37 = sbr.rel (0) target = $region13
    $region12: #{tpu_custom_call.1} parent=1 // pred_region
      _
    $region13: #{tpu_custom_call.1} parent=1 // pred_fallthru
      _
    // Predicated region
    $region14: #{tpu_custom_call.1} parent=1 // pred_check
      _
    $region15: #{tpu_custom_call.1} parent=1 // pred_check_branch
      %39 = sbr.rel (0) target = $region17
    $region16: #{tpu_custom_call.1} parent=1 // pred_region
      _
    $region17: #{tpu_custom_call.1} parent=1 // pred_fallthru
      _
    // Predicated region
    $region18: #{tpu_custom_call.1} parent=1 // pred_check
      _
    $region19: #{tpu_custom_call.1} parent=1 // pred_check_branch
      %41 = sbr.rel (0) target = $region21
    $region20: #{tpu_custom_call.1} parent=1 // pred_region
      %42 = dma.done [#allocation4], 128
    $region21: #{tpu_custom_call.1} parent=1 // pred_fallthru
      _
    // Predicated region
    $region22: #{tpu_custom_call.1} parent=1 // pred_check
      _
    $region23: #{tpu_custom_call.1} parent=1 // pred_check_branch
      %44 = sbr.rel (0) target = $region25
    $region24: #{tpu_custom_call.1} parent=1 // pred_region
      %45 = dma.done [#allocation7], 1024
    $region25: #{tpu_custom_call.1} parent=1 // pred_fallthru
      _
    %v47 = vld [vmem:[#allocation3] sm:$0xf]
    %v48 = vld [vmem:[#allocation3 + $0x4] sm:$0xf]
    %vm49 = vcmask 257024
    %50 = vst.msk [vmem:[#allocation2] sm:$0xf] %vm49, %v47
    %51 = vst.msk [vmem:[#allocation2 + $0x8] sm:$0xf] %vm49, %v48
    %vm52 = vcmask 254976
    %vm53 = vsmask.f32 1280
    %vm54 = vmand %vm52, %vm53
    %v55 = vld [vmem:[#allocation2 + $0x4] sm:$0x3]
    %v56 = vsel %vm54, 0, %v55
    %57 = vst [vmem:[#allocation2 + $0x4] sm:$0x3] %v56
    %v58 = vld [vmem:[#allocation2 + $0xc] sm:$0x3]
    %v59 = vsel %vm54, 0, %v58
    %60 = vst [vmem:[#allocation2 + $0xc] sm:$0x3] %v59
    %v61 = vld [vmem:[#allocation2] sm:$0xf]
    %v62 = vld [vmem:[#allocation2 + $0x8] sm:$0xf]
    %v63 = vld [vmem:[#allocation6] sm:$0xf]
    %v64 = vld [vmem:[#allocation6 + $0x4] sm:$0xf]
    %v65 = vld [vmem:[#allocation6 + $0x8] sm:$0xf]
    %v66 = vld [vmem:[#allocation6 + $0xc] sm:$0xf]
    %v67 = vld [vmem:[#allocation2 + $0x4] sm:$0x1]
    %v68 = vld [vmem:[#allocation2 + $0xc] sm:$0x1]
    %s69 = scalar_lea.vmem [#allocation6], 16
    %v70 = vld [vmem:[%s69] sm:$0xf]
    %v71 = vld [vmem:[%s69 + $0x4] sm:$0xf]
    %v72 = vld [vmem:[%s69 + $0x8] sm:$0xf]
    %v73 = vld [vmem:[%s69 + $0xc] sm:$0xf]
    %vm74 = vsmask.f32 3328
    %vm75 = vsmask.f32 7440
    %vm76 = vmor %vm74, %vm75
    %v78 = vshrl.u32 %v61, 16
    %v80 = vrot.slane %v78, 4
    %v81 = vshll.u32 %v61, 16
    %v83 = vrot.slane %v81, 5
    %v84 = vor.u32 %v80, %v83
    %v85 = vrot.slane %v84, 4
    %v87 = vshll.u32 %v67, 16
    %v89 = vrot.slane %v87, 5
    %v90 = vsel %vm76, %v85, %v89
    %v92 = vshrl.u32 %v62, 16
    %v94 = vrot.slane %v92, 4
    %v95 = vshll.u32 %v62, 16
    %v97 = vrot.slane %v95, 5
    %v98 = vor.u32 %v94, %v97
    %v99 = vrot.slane %v98, 4
    %v101 = vshll.u32 %v68, 16
    %v103 = vrot.slane %v101, 5
    %v104 = vsel %vm76, %v99, %v103
    %v105 = vunpack.c.l.b16 %v90
    %v106 = vunpack.c.l.b16 %v104
    %v107 = vpack.c.b16 %v106, %v105
    %v112 = vunpack.c.l.b16 %v70
    %v113 = vunpack.c.l.b16 %v71
    %v114 = vunpack.c.l.b16 %v72
    %v115 = vunpack.c.l.b16 %v73
    %v116 = vpack.c.b16 %v113, %v112
    %v117 = vpack.c.b16 %v115, %v114
    %vm120 = vcmask 261120
    %v122 = vsel %vm120, %v107, 0
    %124 = vmatprep.subr.bf16.mxu0 0
    %125 = vmatpush1.bf16.msra.mxu0 %v116
    %126 = vmatprep.subr.bf16.mxu0 0
    %127 = vmatpush1.bf16.msra.mxu0 %v117
    %128 = vmatprep.subr.bf16.mxu0 0
    %129 = vmatpush1.bf16.msra.mxu0 0
    %130 = vmatprep.subr.bf16.mxu0 0
    %131 = vmatpush1.bf16.msra.mxu0 0
    %132 = vmatprep.subr.bf16.mxu0 0
    %133 = vmatpush1.bf16.msra.mxu0 0
    %134 = vmatprep.subr.bf16.mxu0 0
    %135 = vmatpush1.bf16.msra.mxu0 0
    %136 = vmatprep.subr.bf16.mxu0 0
    %137 = vmatpush1.bf16.msra.mxu0 0
    %138 = vmatprep.subr.bf16.mxu0 0
    %139 = vmatpush1.bf16.msra.mxu0 0
    %140 = vmatprep.subr.bf16.mxu0 0
    %141 = vmatpush1.bf16.msra.mxu0 0
    %142 = vmatprep.subr.bf16.mxu0 0
    %143 = vmatpush1.bf16.msra.mxu0 0
    %144 = vmatprep.subr.bf16.mxu0 0
    %145 = vmatpush1.bf16.msra.mxu0 0
    %146 = vmatprep.subr.bf16.mxu0 0
    %147 = vmatpush1.bf16.msra.mxu0 0
    %148 = vmatprep.subr.bf16.mxu0 0
    %149 = vmatpush1.bf16.msra.mxu0 0
    %150 = vmatprep.subr.bf16.mxu0 0
    %151 = vmatpush1.bf16.msra.mxu0 0
    %152 = vmatprep.subr.bf16.mxu0 0
    %153 = vmatpush1.bf16.msra.mxu0 0
    %154 = vmatprep.subr.bf16.mxu0 0
    %155 = vmatpush1.bf16.msra.mxu0 0
    %156 = vmatprep.mubr.bf16.mxu0 0
    %157 = vmatmul.mubr.bf16.gmra.mrb[0].mxu0 %v122
    %v158 = vpop.f32.mrb[0].mxu0
    %v159 = vadd.f32 0.0, %v158
    %v160 = vpop.f32.mrb[0].mxu0
    %v161 = vpop.f32.mrb[0].mxu0
    %v162 = vadd.f32 0.0, %v161
    %v163 = vpop.f32.mrb[0].mxu0
    %164 = vdwg.mxu0
    %v167 = vunpack.c.l.b16 %v61
    %v168 = vunpack.c.l.b16 %v62
    %v169 = vpack.c.b16 %v168, %v167
    %v174 = vunpack.c.l.b16 %v63
    %v175 = vunpack.c.l.b16 %v64
    %v176 = vunpack.c.l.b16 %v65
    %v177 = vunpack.c.l.b16 %v66
    %v178 = vpack.c.b16 %v175, %v174
    %v179 = vpack.c.b16 %v177, %v176
    %v183 = vsel %vm120, %v169, 0
    %185 = vmatprep.subr.bf16.mxu0 0
    %186 = vmatpush1.bf16.msra.mxu0 %v178
    %187 = vmatprep.subr.bf16.mxu0 0
    %188 = vmatpush1.bf16.msra.mxu0 %v179
    %189 = vmatprep.subr.bf16.mxu0 0
    %190 = vmatpush1.bf16.msra.mxu0 0
    %191 = vmatprep.subr.bf16.mxu0 0
    %192 = vmatpush1.bf16.msra.mxu0 0
    %193 = vmatprep.subr.bf16.mxu0 0
    %194 = vmatpush1.bf16.msra.mxu0 0
    %195 = vmatprep.subr.bf16.mxu0 0
    %196 = vmatpush1.bf16.msra.mxu0 0
    %197 = vmatprep.subr.bf16.mxu0 0
    %198 = vmatpush1.bf16.msra.mxu0 0
    %199 = vmatprep.subr.bf16.mxu0 0
    %200 = vmatpush1.bf16.msra.mxu0 0
    %201 = vmatprep.subr.bf16.mxu0 0
    %202 = vmatpush1.bf16.msra.mxu0 0
    %203 = vmatprep.subr.bf16.mxu0 0
    %204 = vmatpush1.bf16.msra.mxu0 0
    %205 = vmatprep.subr.bf16.mxu0 0
    %206 = vmatpush1.bf16.msra.mxu0 0
    %207 = vmatprep.subr.bf16.mxu0 0
    %208 = vmatpush1.bf16.msra.mxu0 0
    %209 = vmatprep.subr.bf16.mxu0 0
    %210 = vmatpush1.bf16.msra.mxu0 0
    %211 = vmatprep.subr.bf16.mxu0 0
    %212 = vmatpush1.bf16.msra.mxu0 0
    %213 = vmatprep.subr.bf16.mxu0 0
    %214 = vmatpush1.bf16.msra.mxu0 0
    %215 = vmatprep.subr.bf16.mxu0 0
    %216 = vmatpush1.bf16.msra.mxu0 0
    %217 = vmatprep.mubr.bf16.mxu0 0
    %218 = vmatmul.mubr.bf16.gmra.mrb[0].mxu0 %v183
    %v219 = vpop.f32.mrb[0].mxu0
    %v220 = vadd.f32 %v159, %v219
    %v221 = vpop.f32.mrb[0].mxu0
    %v222 = vpop.f32.mrb[0].mxu0
    %v223 = vadd.f32 %v162, %v222
    %v224 = vpop.f32.mrb[0].mxu0
    %225 = vdwg.mxu0
    %v226 = vld [vmem:[#allocation2] sm:$0xe]
    %v227 = vld [vmem:[#allocation2 + $0x8] sm:$0xe]
    %s228 = scalar_lea.vmem [#allocation6], 32
    %v229 = vld [vmem:[%s228] sm:$0xf]
    %v230 = vld [vmem:[%s228 + $0x4] sm:$0xf]
    %v231 = vld [vmem:[%s228 + $0x8] sm:$0xf]
    %v232 = vld [vmem:[%s228 + $0xc] sm:$0xf]
    %vm237 = vcmask 1042432
    %vm238 = vcmask 1046532
    %vm239 = vmor %vm237, %vm238
    %v240 = vrot.slane %v226, 5
    %v241 = vrot.slane %v240, 4
    %v242 = vrot.slane %v67, 5
    %v243 = vsel %vm239, %v241, %v242
    %v244 = vrot.slane %v227, 5
    %v245 = vrot.slane %v244, 4
    %v246 = vrot.slane %v68, 5
    %v247 = vsel %vm239, %v245, %v246
    %v248 = vunpack.c.l.b16 %v243
    %v249 = vunpack.c.l.b16 %v247
    %v250 = vpack.c.b16 %v249, %v248
    %v255 = vunpack.c.l.b16 %v229
    %v256 = vunpack.c.l.b16 %v230
    %v257 = vunpack.c.l.b16 %v231
    %v258 = vunpack.c.l.b16 %v232
    %v259 = vpack.c.b16 %v256, %v255
    %v260 = vpack.c.b16 %v258, %v257
    %v264 = vsel %vm120, %v250, 0
    %266 = vmatprep.subr.bf16.mxu0 0
    %267 = vmatpush1.bf16.msra.mxu0 %v259
    %268 = vmatprep.subr.bf16.mxu0 0
    %269 = vmatpush1.bf16.msra.mxu0 %v260
    %270 = vmatprep.subr.bf16.mxu0 0
    %271 = vmatpush1.bf16.msra.mxu0 0
    %272 = vmatprep.subr.bf16.mxu0 0
    %273 = vmatpush1.bf16.msra.mxu0 0
    %274 = vmatprep.subr.bf16.mxu0 0
    %275 = vmatpush1.bf16.msra.mxu0 0
    %276 = vmatprep.subr.bf16.mxu0 0
    %277 = vmatpush1.bf16.msra.mxu0 0
    %278 = vmatprep.subr.bf16.mxu0 0
    %279 = vmatpush1.bf16.msra.mxu0 0
    %280 = vmatprep.subr.bf16.mxu0 0
    %281 = vmatpush1.bf16.msra.mxu0 0
    %282 = vmatprep.subr.bf16.mxu0 0
    %283 = vmatpush1.bf16.msra.mxu0 0
    %284 = vmatprep.subr.bf16.mxu0 0
    %285 = vmatpush1.bf16.msra.mxu0 0
    %286 = vmatprep.subr.bf16.mxu0 0
    %287 = vmatpush1.bf16.msra.mxu0 0
    %288 = vmatprep.subr.bf16.mxu0 0
    %289 = vmatpush1.bf16.msra.mxu0 0
    %290 = vmatprep.subr.bf16.mxu0 0
    %291 = vmatpush1.bf16.msra.mxu0 0
    %292 = vmatprep.subr.bf16.mxu0 0
    %293 = vmatpush1.bf16.msra.mxu0 0
    %294 = vmatprep.subr.bf16.mxu0 0
    %295 = vmatpush1.bf16.msra.mxu0 0
    %296 = vmatprep.subr.bf16.mxu0 0
    %297 = vmatpush1.bf16.msra.mxu0 0
    %298 = vmatprep.mubr.bf16.mxu0 0
    %299 = vmatmul.mubr.bf16.gmra.mrb[0].mxu0 %v264
    %v300 = vpop.f32.mrb[0].mxu0
    %v301 = vadd.f32 0.0, %v300
    %v302 = vpop.f32.mrb[0].mxu0
    %v303 = vpop.f32.mrb[0].mxu0
    %v304 = vadd.f32 0.0, %v303
    %v305 = vpop.f32.mrb[0].mxu0
    %306 = vdwg.mxu0
    %v307 = vadd.f32 %v220, %v301
    %v308 = vadd.f32 %v223, %v304
    %v309 = vld [vmem:[#allocation2 + $0x4] sm:$0x3]
    %v310 = vld [vmem:[#allocation2 + $0xc] sm:$0x3]
    %s311 = scalar_lea.vmem [#allocation6], 48
    %v312 = vld [vmem:[%s311] sm:$0xf]
    %v313 = vld [vmem:[%s311 + $0x4] sm:$0xf]
    %v314 = vld [vmem:[%s311 + $0x8] sm:$0xf]
    %v315 = vld [vmem:[%s311 + $0xc] sm:$0xf]
    %vm316 = vsmask.f32 2304
    %vm317 = vsmask.f32 6416
    %vm318 = vmor %vm316, %vm317
    %v320 = vshrl.u32 %v226, 16
    %v322 = vrot.slane %v320, 5
    %v323 = vshll.u32 %v226, 16
    %v325 = vrot.slane %v323, 6
    %v326 = vor.u32 %v322, %v325
    %v327 = vrot.slane %v326, 4
    %v329 = vshrl.u32 %v309, 16
    %v331 = vrot.slane %v329, 5
    %v332 = vshll.u32 %v309, 16
    %v334 = vrot.slane %v332, 6
    %v335 = vor.u32 %v331, %v334
    %v336 = vsel %vm318, %v327, %v335
    %v338 = vshrl.u32 %v227, 16
    %v340 = vrot.slane %v338, 5
    %v341 = vshll.u32 %v227, 16
    %v343 = vrot.slane %v341, 6
    %v344 = vor.u32 %v340, %v343
    %v345 = vrot.slane %v344, 4
    %v347 = vshrl.u32 %v310, 16
    %v349 = vrot.slane %v347, 5
    %v350 = vshll.u32 %v310, 16
    %v352 = vrot.slane %v350, 6
    %v353 = vor.u32 %v349, %v352
    %v354 = vsel %vm318, %v345, %v353
    %v355 = vunpack.c.l.b16 %v336
    %v356 = vunpack.c.l.b16 %v354
    %v357 = vpack.c.b16 %v356, %v355
    %v362 = vunpack.c.l.b16 %v312
    %v363 = vunpack.c.l.b16 %v313
    %v364 = vunpack.c.l.b16 %v314
    %v365 = vunpack.c.l.b16 %v315
    %v366 = vpack.c.b16 %v363, %v362
    %v367 = vpack.c.b16 %v365, %v364
    %v371 = vsel %vm120, %v357, 0
    %373 = vmatprep.subr.bf16.mxu0 0
    %374 = vmatpush1.bf16.msra.mxu0 %v366
    %375 = vmatprep.subr.bf16.mxu0 0
    %376 = vmatpush1.bf16.msra.mxu0 %v367
    %377 = vmatprep.subr.bf16.mxu0 0
    %378 = vmatpush1.bf16.msra.mxu0 0
    %379 = vmatprep.subr.bf16.mxu0 0
    %380 = vmatpush1.bf16.msra.mxu0 0
    %381 = vmatprep.subr.bf16.mxu0 0
    %382 = vmatpush1.bf16.msra.mxu0 0
    %383 = vmatprep.subr.bf16.mxu0 0
    %384 = vmatpush1.bf16.msra.mxu0 0
    %385 = vmatprep.subr.bf16.mxu0 0
    %386 = vmatpush1.bf16.msra.mxu0 0
    %387 = vmatprep.subr.bf16.mxu0 0
    %388 = vmatpush1.bf16.msra.mxu0 0
    %389 = vmatprep.subr.bf16.mxu0 0
    %390 = vmatpush1.bf16.msra.mxu0 0
    %391 = vmatprep.subr.bf16.mxu0 0
    %392 = vmatpush1.bf16.msra.mxu0 0
    %393 = vmatprep.subr.bf16.mxu0 0
    %394 = vmatpush1.bf16.msra.mxu0 0
    %395 = vmatprep.subr.bf16.mxu0 0
    %396 = vmatpush1.bf16.msra.mxu0 0
    %397 = vmatprep.subr.bf16.mxu0 0
    %398 = vmatpush1.bf16.msra.mxu0 0
    %399 = vmatprep.subr.bf16.mxu0 0
    %400 = vmatpush1.bf16.msra.mxu0 0
    %401 = vmatprep.subr.bf16.mxu0 0
    %402 = vmatpush1.bf16.msra.mxu0 0
    %403 = vmatprep.subr.bf16.mxu0 0
    %404 = vmatpush1.bf16.msra.mxu0 0
    %405 = vmatprep.mubr.bf16.mxu0 0
    %406 = vmatmul.mubr.bf16.gmra.mrb[0].mxu0 %v371
    %v407 = vpop.f32.mrb[0].mxu0
    %v408 = vadd.f32 0.0, %v407
    %v409 = vpop.f32.mrb[0].mxu0
    %v410 = vpop.f32.mrb[0].mxu0
    %v411 = vadd.f32 0.0, %v410
    %v412 = vpop.f32.mrb[0].mxu0
    %413 = vdwg.mxu0
    %v414 = vadd.f32 %v307, %v408
    %v415 = vadd.f32 %v308, %v411
    %vm416 = vcmask 1044480
    %v417 = vsel %vm416, %v414, -inf
    %v418 = vrot.slane %v417, 4
    %v419 = vmax.f32 %v417, %v418
    %v420 = vrot.slane %v419, 2
    %v421 = vmax.f32 %v419, %v420
    %v422 = vrot.slane %v421, 1
    %v423 = vmax.f32 %v421, %v422
    %v424 = vsel %vm416, %v415, -inf
    %v425 = vrot.slane %v424, 4
    %v426 = vmax.f32 %v424, %v425
    %v427 = vrot.slane %v426, 2
    %v428 = vmax.f32 %v426, %v427
    %v429 = vrot.slane %v428, 1
    %v430 = vmax.f32 %v428, %v429
    %v431 = vld [vmem:[%s3] sm:$0x7]
    %v433 = vrot.slane %v431, 3
    %v435 = vadd.f32 %v414, %v433
    %v436 = vadd.f32 %v415, %v433
    %vm437 = vcmask 1047557
    %v438 = vsel %vm437, %v435, -inf
    %v439 = vrot.slane %v438, 4
    %v440 = vmax.f32 %v438, %v439
    %v441 = vrot.slane %v440, 2
    %v442 = vmax.f32 %v440, %v441
    %v443 = vrot.slane %v442, 1
    %v444 = vmax.f32 %v442, %v443
    %v445 = vsel %vm437, %v436, -inf
    %v446 = vrot.slane %v445, 4
    %v447 = vmax.f32 %v445, %v446
    %v448 = vrot.slane %v447, 2
    %v449 = vmax.f32 %v447, %v448
    %v450 = vrot.slane %v449, 1
    %v451 = vmax.f32 %v449, %v450
    %v452 = vmax.f32 %v423, %v444
    %v453 = vmax.f32 %v430, %v451
    %v454 = vld [vmem:[%s2] sm:$0x1]
    %v456 = vlaneseq
    %v457 = vshrl.u32 %v456, 7
    %v458 = vsub.s32 0, %v457
    %v459 = vrot.slane %v454, %v458
    %v461 = vadd.f32 %v452, %v459
    %v462 = vadd.f32 %v453, %v459
    %v463 = vmax.f32 %v461, 0.0
    %v464 = vmax.f32 %v462, 0.0
    %v467 = vrot.slane %v464, 7
    %vm468 = vcmask 1041409
    %v469 = vsel %vm468, %v467, %v463
    %471 = vst [vmem:[#allocation8] sm:$0x3] %v469
    // Predicated region
    $region26: #{tpu_custom_call.1} parent=1 // pred_check
      _
    $region27: #{tpu_custom_call.1} parent=1 // pred_check_branch
      %473 = sbr.rel (0) target = $region29
    $region28: #{tpu_custom_call.1} parent=1 // pred_region
      %s475 = ssub.s32 32, 32
      %476 = vsyncadd [#allocation5], %s475
      %s478 = sshll.u32 [#allocation8], 4
      %s479 = int_to_ptr.vmem [resolvable:$true] %s478
      %481 = dma.vmem_to_hbm [thread:$0]  %s479, 32, %s4, [#allocation5]
    $region29: #{tpu_custom_call.1} parent=1 // pred_fallthru
      _
    // Predicated region
    $region30: #{tpu_custom_call.1} parent=1 // pred_check
      _
    $region31: #{tpu_custom_call.1} parent=1 // pred_check_branch
      %483 = sbr.rel (0) target = $region33
    $region32: #{tpu_custom_call.1} parent=1 // pred_region
      %484 = dma.done [#allocation5], 32
    $region33: #{tpu_custom_call.1} parent=1 // pred_fallthru
      _
    %485 = vsyncpa [#allocation4], 1
    %486 = vsyncpa [#allocation7], 1
    %487 = vsyncpa [#allocation5], 1

</llo_original>
